<compile_context>
chip_gen: v7x
topology: tpu7x:2x2x1
jax: 0.10.0
libtpu: 0.0.40
codegen_flags: <defaults>
</compile_context>

<pallas_src>
import jax
import jax.numpy as jnp
from jax import lax
from jax.experimental import pallas as pl
from jax.experimental.pallas import tpu as pltpu


def _round_up(n, m):
    return ((n + m - 1) // m) * m


def _mlp_kernel(x_ref,
                w1_ref, b1_ref,
                w2_ref, b2_ref,
                w3_ref, b3_ref,
                w4_ref, b4_ref,
                o_ref):
    # x tile: (TB, 13) float32/bf16, natural HBM layout (batch on sublanes).
    x = x_ref[...]

    # Layer 1: W1 (64,13) . x^T -> (64, TB).  Contract the feature dim of both
    # operands; batch moves to the lane axis and stays there for all later layers.
    w1 = w1_ref[...].astype(x.dtype)          # cheap per-step cast of resident 64x13
    h = lax.dot_general(w1, x,
                        dimension_numbers=(((1,), (1,)), ((), ())),
                        preferred_element_type=jnp.float32)
    h = jnp.maximum(h + b1_ref[...], 0.0)     # (64, TB)

    h = jnp.dot(w2_ref[...], h, preferred_element_type=jnp.float32) + b2_ref[...]
    h = jnp.maximum(h, 0.0)                   # (32, TB)

    h = jnp.dot(w3_ref[...], h, preferred_element_type=jnp.float32) + b3_ref[...]
    h = jnp.maximum(h, 0.0)                   # (8, TB)

    # Final Linear(8,1): (8,1) weights -> VPU multiply + sublane (XLU) reduce.
    o_ref[...] = (jnp.sum(w4_ref[...] * h, axis=0, keepdims=True)
                  + b4_ref[...]).astype(o_ref.dtype)     # (1, TB)


def _chip_vmem_bytes():
    try:
        return int(pltpu.get_tpu_info().vmem_capacity_bytes)
    except Exception:
        return 64 << 20      # conservative (v7x-sized) if the query is unavailable


def mymodel1_forward(x, params, *, block_b=None, stream_dtype=jnp.float32):
    """x: (B, 13) array.  params: 4 (W, b) pairs with W shaped (out, in) and b shaped
    (out, 1) (PyTorch layout).  Returns (B, 1) float32, matching MyModel1.forward."""
    (w1, b1), (w2, b2), (w3, b3), (w4, b4) = params
    B = x.shape[0]

    # data.to(torch.float32) semantics; optionally stream x as bf16 to halve HBM.
    x = x.astype(stream_dtype)

    # Per-generation tiling: big tiles amortize per-grid-step overhead.
    vmem_cap = _chip_vmem_bytes()
    big_vmem = vmem_cap >= (100 << 20)            # v5e / v6e: 128 MiB physical VMEM
    if block_b is None:
        block_b = 32768 if big_vmem else 16384    # v7x: 64 MiB physical -> smaller tile
    vmem_limit = (80 << 20) if big_vmem else (44 << 20)

    TB = min(_round_up(block_b, 128), _round_up(B, 128))
    grid = (pl.cdiv(B, TB),)
    Bp = grid[0] * TB                             # padded output columns (no input pad)

    w4t = w4.reshape(-1, 1)                       # (1,8) -> (8,1), free reshape

    def _resident(a):
        # Full-array block, same block index every grid step -> stays VMEM-resident.
        return pl.BlockSpec(a.shape, lambda i: (0, 0))

    out_t = pl.pallas_call(
        _mlp_kernel,
        out_shape=jax.ShapeDtypeStruct((1, Bp), jnp.float32),
        grid=grid,
        in_specs=[
            # x streams in natural (B,13) layout; ragged last tile is handled by
            # Pallas (only valid rows are DMA'd; garbage tail columns are sliced off).
            pl.BlockSpec((TB, 13), lambda i: (i, 0)),
            _resident(w1), _resident(b1),
            _resident(w2), _resident(b2),
            _resident(w3), _resident(b3),
            _resident(w4t), _resident(b4),
        ],
        out_specs=pl.BlockSpec((1, TB), lambda i: (0, i)),
        compiler_params=pltpu.CompilerParams(
            dimension_semantics=("parallel",),
            vmem_limit_bytes=vmem_limit),
    )(x, w1, b1, w2, b2, w3, b3, w4t, b4)

    return out_t[0, :B].reshape(B, 1)             # (B, 1)


def init_params(key):
    """Deterministic PyTorch-style (uniform +-1/sqrt(fan_in)) init.
    Weights stored (out_features, in_features); biases stored (out_features, 1)."""
    dims = [(13, 64), (64, 32), (32, 8), (8, 1)]
    params = []
    for fan_in, fan_out in dims:
        kw, kb, key = jax.random.split(key, 3)
        bound = 1.0 / jnp.sqrt(jnp.float32(fan_in))
        w = jax.random.uniform(kw, (fan_out, fan_in), jnp.float32, -bound, bound)
        b = jax.random.uniform(kb, (fan_out, 1), jnp.float32, -bound, bound)
        params.append((w, b))
    return params


def _reference_forward(x, params):
    """Plain-JAX reference (same math as the PyTorch module)."""
    h = x.astype(jnp.float32)
    for i, (w, b) in enumerate(params):
        h = h @ w.T + b[:, 0]
        if i < len(params) - 1:
            h = jnp.maximum(h, 0.0)
    return h


if __name__ == "__main__":
    key = jax.random.PRNGKey(0)
    k_x, k_p = jax.random.split(key)

    batch = 8
    x = jax.random.normal(k_x, (batch, 13), dtype=jnp.float32)

    params = init_params(k_p)

    out = mymodel1_forward(x, params)
    out = jax.block_until_ready(out)

    ref = _reference_forward(x, params)
    assert out.shape == (batch, 1), out.shape
    assert jnp.allclose(out, ref, atol=5e-5, rtol=5e-5), "mismatch vs reference"

    print("KERNEL_OK")
</pallas_src>

<mosaic_0001>
module attributes {stable_mosaic.version = 11 : i64} {
  func.func @_mlp_kernel(%arg0: i32, %arg1: memref<128x13xf32, #tpu.memory_space<vmem>>, %arg2: memref<64x13xf32, #tpu.memory_space<vmem>>, %arg3: memref<64x1xf32, #tpu.memory_space<vmem>>, %arg4: memref<32x64xf32, #tpu.memory_space<vmem>>, %arg5: memref<32x1xf32, #tpu.memory_space<vmem>>, %arg6: memref<8x32xf32, #tpu.memory_space<vmem>>, %arg7: memref<8x1xf32, #tpu.memory_space<vmem>>, %arg8: memref<8x1xf32, #tpu.memory_space<vmem>>, %arg9: memref<1x1xf32, #tpu.memory_space<vmem>>, %arg10: memref<1x128xf32, #tpu.memory_space<vmem>>) attributes {dimension_semantics = [#tpu.dimension_semantics<parallel>], iteration_bounds = array<i64: 1>, scalar_prefetch = 0 : i64, scratch_operands = 0 : i64, tpu.core_type = #tpu.core_type<tc>, window_params = [{transform_indices = @transform_0, window_bounds = array<i64: 128, 13>}, {pipeline_mode = #tpu.pipeline_mode<synchronous>, transform_indices = @transform_1, window_bounds = array<i64: 64, 13>}, {pipeline_mode = #tpu.pipeline_mode<synchronous>, transform_indices = @transform_2, window_bounds = array<i64: 64, 1>}, {pipeline_mode = #tpu.pipeline_mode<synchronous>, transform_indices = @transform_3, window_bounds = array<i64: 32, 64>}, {pipeline_mode = #tpu.pipeline_mode<synchronous>, transform_indices = @transform_4, window_bounds = array<i64: 32, 1>}, {pipeline_mode = #tpu.pipeline_mode<synchronous>, transform_indices = @transform_5, window_bounds = array<i64: 8, 32>}, {pipeline_mode = #tpu.pipeline_mode<synchronous>, transform_indices = @transform_6, window_bounds = array<i64: 8, 1>}, {pipeline_mode = #tpu.pipeline_mode<synchronous>, transform_indices = @transform_7, window_bounds = array<i64: 8, 1>}, {pipeline_mode = #tpu.pipeline_mode<synchronous>, transform_indices = @transform_8, window_bounds = array<i64: 1, 1>}, {transform_indices = @transform_9, window_bounds = array<i64: 1, 128>}]} {
    %c0 = arith.constant 0 : index
    %c0_0 = arith.constant 0 : index
    %0 = vector.load %arg1[%c0, %c0_0] : memref<128x13xf32, #tpu.memory_space<vmem>>, vector<128x13xf32>
    %c0_1 = arith.constant 0 : index
    %c0_2 = arith.constant 0 : index
    %1 = vector.load %arg2[%c0_1, %c0_2] : memref<64x13xf32, #tpu.memory_space<vmem>>, vector<64x13xf32>
    %cst = arith.constant dense<0.000000e+00> : vector<64x128xf32>
    %2 = tpu.matmul %1, %0, %cst {dimension_numbers = #tpu.dot_dimension_numbers<[1], [1], [0], [0], [0, 0, 1, 0], [], []>} : vector<64x13xf32>, vector<128x13xf32>, vector<64x128xf32> -> vector<64x128xf32>
    %c0_3 = arith.constant 0 : index
    %c0_4 = arith.constant 0 : index
    %3 = vector.load %arg3[%c0_3, %c0_4] : memref<64x1xf32, #tpu.memory_space<vmem>>, vector<64x1xf32>
    %4 = vector.broadcast %3 : vector<64x1xf32> to vector<64x128xf32>
    %5 = arith.addf %2, %4 : vector<64x128xf32>
    %cst_5 = arith.constant 0.000000e+00 : f32
    %6 = vector.broadcast %cst_5 : f32 to vector<64x128xf32>
    %7 = arith.maximumf %5, %6 : vector<64x128xf32>
    %c0_6 = arith.constant 0 : index
    %c0_7 = arith.constant 0 : index
    %8 = vector.load %arg4[%c0_6, %c0_7] : memref<32x64xf32, #tpu.memory_space<vmem>>, vector<32x64xf32>
    %cst_8 = arith.constant dense<0.000000e+00> : vector<32x128xf32>
    %9 = tpu.matmul %8, %7, %cst_8 {dimension_numbers = #tpu.dot_dimension_numbers<[1], [0], [0], [1], [0, 0, 1, 1], [], []>} : vector<32x64xf32>, vector<64x128xf32>, vector<32x128xf32> -> vector<32x128xf32>
    %c0_9 = arith.constant 0 : index
    %c0_10 = arith.constant 0 : index
    %10 = vector.load %arg5[%c0_9, %c0_10] : memref<32x1xf32, #tpu.memory_space<vmem>>, vector<32x1xf32>
    %11 = vector.broadcast %10 : vector<32x1xf32> to vector<32x128xf32>
    %12 = arith.addf %9, %11 : vector<32x128xf32>
    %cst_11 = arith.constant 0.000000e+00 : f32
    %13 = vector.broadcast %cst_11 : f32 to vector<32x128xf32>
    %14 = arith.maximumf %12, %13 : vector<32x128xf32>
    %c0_12 = arith.constant 0 : index
    %c0_13 = arith.constant 0 : index
    %15 = vector.load %arg6[%c0_12, %c0_13] : memref<8x32xf32, #tpu.memory_space<vmem>>, vector<8x32xf32>
    %cst_14 = arith.constant dense<0.000000e+00> : vector<8x128xf32>
    %16 = tpu.matmul %15, %14, %cst_14 {dimension_numbers = #tpu.dot_dimension_numbers<[1], [0], [0], [1], [0, 0, 1, 1], [], []>} : vector<8x32xf32>, vector<32x128xf32>, vector<8x128xf32> -> vector<8x128xf32>
    %c0_15 = arith.constant 0 : index
    %c0_16 = arith.constant 0 : index
    %17 = vector.load %arg7[%c0_15, %c0_16] : memref<8x1xf32, #tpu.memory_space<vmem>>, vector<8x1xf32>
    %18 = vector.broadcast %17 : vector<8x1xf32> to vector<8x128xf32>
    %19 = arith.addf %16, %18 : vector<8x128xf32>
    %cst_17 = arith.constant 0.000000e+00 : f32
    %20 = vector.broadcast %cst_17 : f32 to vector<8x128xf32>
    %21 = arith.maximumf %19, %20 : vector<8x128xf32>
    %c0_18 = arith.constant 0 : index
    %c0_19 = arith.constant 0 : index
    %22 = vector.load %arg8[%c0_18, %c0_19] : memref<8x1xf32, #tpu.memory_space<vmem>>, vector<8x1xf32>
    %23 = vector.broadcast %22 : vector<8x1xf32> to vector<8x128xf32>
    %24 = arith.mulf %23, %21 : vector<8x128xf32>
    %cst_20 = arith.constant dense<0.000000e+00> : vector<128xf32>
    %25 = vector.multi_reduction <add>, %24, %cst_20 [0] : vector<8x128xf32> to vector<128xf32>
    %26 = vector.shape_cast %25 : vector<128xf32> to vector<1x128xf32>
    %c0_21 = arith.constant 0 : index
    %c0_22 = arith.constant 0 : index
    %27 = vector.load %arg9[%c0_21, %c0_22] : memref<1x1xf32, #tpu.memory_space<vmem>>, vector<1x1xf32>
    %28 = vector.broadcast %27 : vector<1x1xf32> to vector<1x128xf32>
    %29 = arith.addf %26, %28 : vector<1x128xf32>
    %c0_23 = arith.constant 0 : index
    %c0_24 = arith.constant 0 : index
    %30 = vector.load %arg10[%c0_23, %c0_24] : memref<1x128xf32, #tpu.memory_space<vmem>>, vector<1x128xf32>
    tpu.vector_store %arg10[%c0_23, %c0_24], %29 {strides = array<i32>} : memref<1x128xf32, #tpu.memory_space<vmem>>, vector<1x128xf32>,
    return
  }
  func.func @transform_0(%arg0: i32) -> (i32, i32) {
    %c0_i32 = arith.constant 0 : i32
    %c0_i32_0 = arith.constant 0 : i32
    return %arg0, %c0_i32 : i32, i32
  }
  func.func @transform_1(%arg0: i32) -> (i32, i32) {
    %c0_i32 = arith.constant 0 : i32
    %c0_i32_0 = arith.constant 0 : i32
    %c0_i32_1 = arith.constant 0 : i32
    return %c0_i32, %c0_i32_0 : i32, i32
  }
  func.func @transform_2(%arg0: i32) -> (i32, i32) {
    %c0_i32 = arith.constant 0 : i32
    %c0_i32_0 = arith.constant 0 : i32
    %c0_i32_1 = arith.constant 0 : i32
    return %c0_i32, %c0_i32_0 : i32, i32
  }
  func.func @transform_3(%arg0: i32) -> (i32, i32) {
    %c0_i32 = arith.constant 0 : i32
    %c0_i32_0 = arith.constant 0 : i32
    %c0_i32_1 = arith.constant 0 : i32
    return %c0_i32, %c0_i32_0 : i32, i32
  }
  func.func @transform_4(%arg0: i32) -> (i32, i32) {
    %c0_i32 = arith.constant 0 : i32
    %c0_i32_0 = arith.constant 0 : i32
    %c0_i32_1 = arith.constant 0 : i32
    return %c0_i32, %c0_i32_0 : i32, i32
  }
  func.func @transform_5(%arg0: i32) -> (i32, i32) {
    %c0_i32 = arith.constant 0 : i32
    %c0_i32_0 = arith.constant 0 : i32
    %c0_i32_1 = arith.constant 0 : i32
    return %c0_i32, %c0_i32_0 : i32, i32
  }
  func.func @transform_6(%arg0: i32) -> (i32, i32) {
    %c0_i32 = arith.constant 0 : i32
    %c0_i32_0 = arith.constant 0 : i32
    %c0_i32_1 = arith.constant 0 : i32
    return %c0_i32, %c0_i32_0 : i32, i32
  }
  func.func @transform_7(%arg0: i32) -> (i32, i32) {
    %c0_i32 = arith.constant 0 : i32
    %c0_i32_0 = arith.constant 0 : i32
    %c0_i32_1 = arith.constant 0 : i32
    return %c0_i32, %c0_i32_0 : i32, i32
  }
  func.func @transform_8(%arg0: i32) -> (i32, i32) {
    %c0_i32 = arith.constant 0 : i32
    %c0_i32_0 = arith.constant 0 : i32
    %c0_i32_1 = arith.constant 0 : i32
    return %c0_i32, %c0_i32_0 : i32, i32
  }
  func.func @transform_9(%arg0: i32) -> (i32, i32) {
    %c0_i32 = arith.constant 0 : i32
    %c0_i32_0 = arith.constant 0 : i32
    return %c0_i32, %arg0 : i32, i32
  }
}

</mosaic_0001>

<llo_original>
// kernel: tpu_custom_call.1
$region0: #{tpu_custom_call.1}
  #allocation0 [shape = 'u32[]', space=smem, size = 0x4, offset = 0x4, fixed_abs, tag = 'smem constant byte address 0x4 - core index']
  #allocation1 [shape = 'u32[144,128]{1,0:T(1,128)}', space=vmem, size = 0x12000, scoped, tag = 'internal scratch']
  #allocation2 [shape = 'f32[1,1]{1,0:T(1,128)S(1)}', space=vmem, size = 0x200, scoped, tag = 'scoped memory for tpu_custom_call.1']
  %s0 = inlined_call_operand.vmem [shape: f32[8,13], index: 0, kind: input, shape index: {}]
  %s1 = inlined_call_operand.vmem [shape: f32[64,13], index: 1, kind: input, shape index: {}]
  %s2 = inlined_call_operand.vmem [shape: f32[64,1], index: 2, kind: input, shape index: {}]
  %s3 = inlined_call_operand.vmem [shape: f32[32,64], index: 3, kind: input, shape index: {}]
  %s4 = inlined_call_operand.vmem [shape: f32[32,1], index: 4, kind: input, shape index: {}]
  %s5 = inlined_call_operand.vmem [shape: f32[8,32], index: 5, kind: input, shape index: {}]
  %s6 = inlined_call_operand.vmem [shape: f32[8,1], index: 6, kind: input, shape index: {}]
  %s7 = inlined_call_operand.vmem [shape: f32[8,1], index: 7, kind: input, shape index: {}]
  %s8 = inlined_call_operand.<no memory space> [shape: f32[1,1], index: 8, kind: input, shape index: {}]
  %s9 = inlined_call_operand.hbm [shape: f32[1,128], index: 9, kind: output, shape index: {}]
  %s10 = sld [smem:[#allocation0]]
  $region46: #{tpu_custom_call.1} parent=0
    _
  %s12 = ssub.s32 1, %s10
  %s13 = scalar_select 0, %s12, %s10
  %v14 = vstv %s8
  %15 = vst [vmem:[#allocation2] sm:$0x1] %v14
  $region1: #{tpu_custom_call.1} parent=0
    #allocation3 [shape = 'u8[512]{0}', space=vmem, size = 0x400, scoped, tag = 'output window, operand 0, single buffered']
    #allocation4 [shape = 's32[1]{0}', space=sflag, size = 0x4, scoped, tag = 'scoped memory for tpu_custom_call.1']
    %16 = vsyncpa [#allocation4], 0
    // Predicated region
    $region2: #{tpu_custom_call.1} parent=1 // pred_check
      _
    $region3: #{tpu_custom_call.1} parent=1 // pred_check_branch
      %18 = sbr.rel (0) target = $region5
    $region4: #{tpu_custom_call.1} parent=1 // pred_region
      _
    $region5: #{tpu_custom_call.1} parent=1 // pred_fallthru
      _
    // Predicated region
    $region6: #{tpu_custom_call.1} parent=1 // pred_check
      _
    $region7: #{tpu_custom_call.1} parent=1 // pred_check_branch
      %20 = sbr.rel (0) target = $region9
    $region8: #{tpu_custom_call.1} parent=1 // pred_region
      _
    $region9: #{tpu_custom_call.1} parent=1 // pred_fallthru
      _
    // Predicated region
    $region10: #{tpu_custom_call.1} parent=1 // pred_check
      _
    $region11: #{tpu_custom_call.1} parent=1 // pred_check_branch
      %22 = sbr.rel (0) target = $region13
    $region12: #{tpu_custom_call.1} parent=1 // pred_region
      _
    $region13: #{tpu_custom_call.1} parent=1 // pred_fallthru
      _
    // Predicated region
    $region14: #{tpu_custom_call.1} parent=1 // pred_check
      _
    $region15: #{tpu_custom_call.1} parent=1 // pred_check_branch
      %24 = sbr.rel (0) target = $region17
    $region16: #{tpu_custom_call.1} parent=1 // pred_region
      _
    $region17: #{tpu_custom_call.1} parent=1 // pred_fallthru
      _
    // Predicated region
    $region18: #{tpu_custom_call.1} parent=1 // pred_check
      _
    $region19: #{tpu_custom_call.1} parent=1 // pred_check_branch
      %26 = sbr.rel (0) target = $region21
    $region20: #{tpu_custom_call.1} parent=1 // pred_region
      _
    $region21: #{tpu_custom_call.1} parent=1 // pred_fallthru
      _
    // Predicated region
    $region22: #{tpu_custom_call.1} parent=1 // pred_check
      _
    $region23: #{tpu_custom_call.1} parent=1 // pred_check_branch
      %28 = sbr.rel (0) target = $region25
    $region24: #{tpu_custom_call.1} parent=1 // pred_region
      _
    $region25: #{tpu_custom_call.1} parent=1 // pred_fallthru
      _
    // Predicated region
    $region26: #{tpu_custom_call.1} parent=1 // pred_check
      _
    $region27: #{tpu_custom_call.1} parent=1 // pred_check_branch
      %30 = sbr.rel (0) target = $region29
    $region28: #{tpu_custom_call.1} parent=1 // pred_region
      _
    $region29: #{tpu_custom_call.1} parent=1 // pred_fallthru
      _
    // Predicated region
    $region30: #{tpu_custom_call.1} parent=1 // pred_check
      _
    $region31: #{tpu_custom_call.1} parent=1 // pred_check_branch
      %32 = sbr.rel (0) target = $region33
    $region32: #{tpu_custom_call.1} parent=1 // pred_region
      _
    $region33: #{tpu_custom_call.1} parent=1 // pred_fallthru
      _
    // Predicated region
    $region34: #{tpu_custom_call.1} parent=1 // pred_check
      _
    $region35: #{tpu_custom_call.1} parent=1 // pred_check_branch
      %34 = sbr.rel (0) target = $region37
    $region36: #{tpu_custom_call.1} parent=1 // pred_region
      _
    $region37: #{tpu_custom_call.1} parent=1 // pred_fallthru
      _
    %v35 = vld [vmem:[%s0] sm:$0xff]
    %v36 = vld [vmem:[%s0 + $0x8] sm:$0xff]
    %v37 = vld [vmem:[%s0 + $0x10] sm:$0xff]
    %v38 = vld [vmem:[%s0 + $0x18] sm:$0xff]
    %v39 = vld [vmem:[%s0 + $0x20] sm:$0xff]
    %v40 = vld [vmem:[%s0 + $0x28] sm:$0xff]
    %v41 = vld [vmem:[%s0 + $0x30] sm:$0xff]
    %v42 = vld [vmem:[%s0 + $0x38] sm:$0xff]
    %v43 = vld [vmem:[%s0 + $0x40] sm:$0xff]
    %v44 = vld [vmem:[%s0 + $0x48] sm:$0xff]
    %v45 = vld [vmem:[%s0 + $0x50] sm:$0xff]
    %v46 = vld [vmem:[%s0 + $0x58] sm:$0xff]
    %v47 = vld [vmem:[%s0 + $0x60] sm:$0xff]
    %v48 = vld [vmem:[%s0 + $0x68] sm:$0xff]
    %v49 = vld [vmem:[%s0 + $0x70] sm:$0xff]
    %v50 = vld [vmem:[%s0 + $0x78] sm:$0xff]
    %v51 = vld [vmem:[%s1] sm:$0xff]
    %v52 = vld [vmem:[%s1 + $0x8] sm:$0xff]
    %v53 = vld [vmem:[%s1 + $0x10] sm:$0xff]
    %v54 = vld [vmem:[%s1 + $0x18] sm:$0xff]
    %v55 = vld [vmem:[%s1 + $0x20] sm:$0xff]
    %v56 = vld [vmem:[%s1 + $0x28] sm:$0xff]
    %v57 = vld [vmem:[%s1 + $0x30] sm:$0xff]
    %v58 = vld [vmem:[%s1 + $0x38] sm:$0xff]
    %v59 = vld [vmem:[%s2] sm:$0xff]
    %v60 = vld [vmem:[%s2 + $0x8] sm:$0xff]
    %v61 = vld [vmem:[%s2 + $0x10] sm:$0xff]
    %v62 = vld [vmem:[%s2 + $0x18] sm:$0xff]
    %v63 = vld [vmem:[%s2 + $0x20] sm:$0xff]
    %v64 = vld [vmem:[%s2 + $0x28] sm:$0xff]
    %v65 = vld [vmem:[%s2 + $0x30] sm:$0xff]
    %v66 = vld [vmem:[%s2 + $0x38] sm:$0xff]
    %68 = vset.pattern.permute.xlu0 0
    %69 = vperm.xlu0 %68, %v59
    %v70 = vpop.permute.xlu0 %69
    %73 = vset.pattern.permute.xlu0 0
    %74 = vperm.xlu0 %73, %v60
    %v75 = vpop.permute.xlu0 %74
    %78 = vset.pattern.permute.xlu0 0
    %79 = vperm.xlu0 %78, %v61
    %v80 = vpop.permute.xlu0 %79
    %83 = vset.pattern.permute.xlu0 0
    %84 = vperm.xlu0 %83, %v62
    %v85 = vpop.permute.xlu0 %84
    %88 = vset.pattern.permute.xlu0 0
    %89 = vperm.xlu0 %88, %v63
    %v90 = vpop.permute.xlu0 %89
    %93 = vset.pattern.permute.xlu0 0
    %94 = vperm.xlu0 %93, %v64
    %v95 = vpop.permute.xlu0 %94
    %98 = vset.pattern.permute.xlu0 0
    %99 = vperm.xlu0 %98, %v65
    %v100 = vpop.permute.xlu0 %99
    %103 = vset.pattern.permute.xlu0 0
    %104 = vperm.xlu0 %103, %v66
    %v105 = vpop.permute.xlu0 %104
    %vm107 = vcmask 105472
    %v109 = vsel %vm107, %v51, 0
    %v112 = vsel %vm107, %v52, 0
    %v115 = vsel %vm107, %v53, 0
    %v118 = vsel %vm107, %v54, 0
    %v121 = vsel %vm107, %v55, 0
    %v124 = vsel %vm107, %v56, 0
    %v127 = vsel %vm107, %v57, 0
    %v130 = vsel %vm107, %v58, 0
    %v133 = vsel %vm107, %v35, 0
    %v136 = vsel %vm107, %v36, 0
    %v139 = vsel %vm107, %v37, 0
    %v142 = vsel %vm107, %v38, 0
    %v145 = vsel %vm107, %v39, 0
    %v148 = vsel %vm107, %v40, 0
    %v151 = vsel %vm107, %v41, 0
    %v154 = vsel %vm107, %v42, 0
    %v157 = vsel %vm107, %v43, 0
    %v160 = vsel %vm107, %v44, 0
    %v163 = vsel %vm107, %v45, 0
    %v166 = vsel %vm107, %v46, 0
    %v169 = vsel %vm107, %v47, 0
    %v172 = vsel %vm107, %v48, 0
    %v175 = vsel %vm107, %v49, 0
    %v178 = vsel %vm107, %v50, 0
    %180 = vmatprep.subr.mxu0 0.0
    %181 = vmatpush1.xpose.msra.mxu0 %v133
    %182 = vmatprep.subr.mxu0 0.0
    %183 = vmatpush1.xpose.msra.mxu0 %v136
    %184 = vmatprep.subr.mxu0 0.0
    %185 = vmatpush1.xpose.msra.mxu0 %v139
    %186 = vmatprep.subr.mxu0 0.0
    %187 = vmatpush1.xpose.msra.mxu0 %v142
    %188 = vmatprep.subr.mxu0 0.0
    %189 = vmatpush1.xpose.msra.mxu0 %v145
    %190 = vmatprep.subr.mxu0 0.0
    %191 = vmatpush1.xpose.msra.mxu0 %v148
    %192 = vmatprep.subr.mxu0 0.0
    %193 = vmatpush1.xpose.msra.mxu0 %v151
    %194 = vmatprep.subr.mxu0 0.0
    %195 = vmatpush1.xpose.msra.mxu0 %v154
    %196 = vmatprep.subr.mxu0 0.0
    %197 = vmatpush1.xpose.msra.mxu0 %v157
    %198 = vmatprep.subr.mxu0 0.0
    %199 = vmatpush1.xpose.msra.mxu0 %v160
    %200 = vmatprep.subr.mxu0 0.0
    %201 = vmatpush1.xpose.msra.mxu0 %v163
    %202 = vmatprep.subr.mxu0 0.0
    %203 = vmatpush1.xpose.msra.mxu0 %v166
    %204 = vmatprep.subr.mxu0 0.0
    %205 = vmatpush1.xpose.msra.mxu0 %v169
    %206 = vmatprep.subr.mxu0 0.0
    %207 = vmatpush1.xpose.msra.mxu0 %v172
    %208 = vmatprep.subr.mxu0 0.0
    %209 = vmatpush1.xpose.msra.mxu0 %v175
    %210 = vmatprep.subr.mxu0 0.0
    %211 = vmatpush1.xpose.msra.mxu0 %v178
    %212 = vmatprep.subr.mxu0 0.0
    %213 = vmatpush1.xpose.msra.mxu0 0.0
    %214 = vmatprep.subr.mxu0 0.0
    %215 = vmatpush1.xpose.msra.mxu0 0.0
    %216 = vmatprep.subr.mxu0 0.0
    %217 = vmatpush1.xpose.msra.mxu0 0.0
    %218 = vmatprep.subr.mxu0 0.0
    %219 = vmatpush1.xpose.msra.mxu0 0.0
    %220 = vmatprep.subr.mxu0 0.0
    %221 = vmatpush1.xpose.msra.mxu0 0.0
    %222 = vmatprep.subr.mxu0 0.0
    %223 = vmatpush1.xpose.msra.mxu0 0.0
    %224 = vmatprep.subr.mxu0 0.0
    %225 = vmatpush1.xpose.msra.mxu0 0.0
    %226 = vmatprep.subr.mxu0 0.0
    %227 = vmatpush1.xpose.msra.mxu0 0.0
    %228 = vmatprep.subr.mxu0 0.0
    %229 = vmatpush1.xpose.msra.mxu0 0.0
    %230 = vmatprep.subr.mxu0 0.0
    %231 = vmatpush1.xpose.msra.mxu0 0.0
    %232 = vmatprep.subr.mxu0 0.0
    %233 = vmatpush1.xpose.msra.mxu0 0.0
    %234 = vmatprep.subr.mxu0 0.0
    %235 = vmatpush1.xpose.msra.mxu0 0.0
    %236 = vmatprep.subr.mxu0 0.0
    %237 = vmatpush1.xpose.msra.mxu0 0.0
    %238 = vmatprep.subr.mxu0 0.0
    %239 = vmatpush1.xpose.msra.mxu0 0.0
    %240 = vmatprep.subr.mxu0 0.0
    %241 = vmatpush1.xpose.msra.mxu0 0.0
    %242 = vmatprep.subr.mxu0 0.0
    %243 = vmatpush1.xpose.msra.mxu0 0.0
    %244 = vmatprep.mubr.f32.mxu0 0.0
    %245 = vmatmul.mubr.f32.gmra.mrb[0].mxu0 %v109
    %v246 = vpop.f32.mrb[0].mxu0
    %v247 = vadd.f32 %v70, %v246
    %v248 = vpop.f32.mrb[0].mxu0
    %249 = vmatprep.mubr.f32.mxu0 0.0
    %250 = vmatmul.mubr.f32.gmra.mrb[0].mxu0 %v112
    %v251 = vpop.f32.mrb[0].mxu0
    %v252 = vadd.f32 %v75, %v251
    %v253 = vpop.f32.mrb[0].mxu0
    %254 = vmatprep.mubr.f32.mxu0 0.0
    %255 = vmatmul.mubr.f32.gmra.mrb[0].mxu0 %v115
    %v256 = vpop.f32.mrb[0].mxu0
    %v257 = vadd.f32 %v80, %v256
    %v258 = vpop.f32.mrb[0].mxu0
    %259 = vmatprep.mubr.f32.mxu0 0.0
    %260 = vmatmul.mubr.f32.gmra.mrb[0].mxu0 %v118
    %v261 = vpop.f32.mrb[0].mxu0
    %v262 = vadd.f32 %v85, %v261
    %v263 = vpop.f32.mrb[0].mxu0
    %264 = vmatprep.mubr.f32.mxu0 0.0
    %265 = vmatmul.mubr.f32.gmra.mrb[0].mxu0 %v121
    %v266 = vpop.f32.mrb[0].mxu0
    %v267 = vadd.f32 %v90, %v266
    %v268 = vpop.f32.mrb[0].mxu0
    %269 = vmatprep.mubr.f32.mxu0 0.0
    %270 = vmatmul.mubr.f32.gmra.mrb[0].mxu0 %v124
    %v271 = vpop.f32.mrb[0].mxu0
    %v272 = vadd.f32 %v95, %v271
    %v273 = vpop.f32.mrb[0].mxu0
    %274 = vmatprep.mubr.f32.mxu0 0.0
    %275 = vmatmul.mubr.f32.gmra.mrb[0].mxu0 %v127
    %v276 = vpop.f32.mrb[0].mxu0
    %v277 = vadd.f32 %v100, %v276
    %v278 = vpop.f32.mrb[0].mxu0
    %279 = vmatprep.mubr.f32.mxu0 0.0
    %280 = vmatmul.mubr.f32.gmra.mrb[0].mxu0 %v130
    %v281 = vpop.f32.mrb[0].mxu0
    %v282 = vadd.f32 %v105, %v281
    %v283 = vpop.f32.mrb[0].mxu0
    %284 = vdwg.mxu0
    %v285 = vmax.f32 %v247, 0.0
    %v286 = vmax.f32 %v252, 0.0
    %v287 = vmax.f32 %v257, 0.0
    %v288 = vmax.f32 %v262, 0.0
    %v289 = vmax.f32 %v267, 0.0
    %v290 = vmax.f32 %v272, 0.0
    %v291 = vmax.f32 %v277, 0.0
    %v292 = vmax.f32 %v282, 0.0
    %v293 = vld [vmem:[%s3] sm:$0xff]
    %v294 = vld [vmem:[%s3 + $0x8] sm:$0xff]
    %v295 = vld [vmem:[%s3 + $0x10] sm:$0xff]
    %v296 = vld [vmem:[%s3 + $0x18] sm:$0xff]
    %v297 = vld [vmem:[%s4] sm:$0xff]
    %v298 = vld [vmem:[%s4 + $0x8] sm:$0xff]
    %v299 = vld [vmem:[%s4 + $0x10] sm:$0xff]
    %v300 = vld [vmem:[%s4 + $0x18] sm:$0xff]
    %302 = vset.pattern.permute.xlu0 0
    %303 = vperm.xlu0 %302, %v297
    %v304 = vpop.permute.xlu0 %303
    %307 = vset.pattern.permute.xlu0 0
    %308 = vperm.xlu0 %307, %v298
    %v309 = vpop.permute.xlu0 %308
    %312 = vset.pattern.permute.xlu0 0
    %313 = vperm.xlu0 %312, %v299
    %v314 = vpop.permute.xlu0 %313
    %317 = vset.pattern.permute.xlu0 0
    %318 = vperm.xlu0 %317, %v300
    %v319 = vpop.permute.xlu0 %318
    %vm321 = vcmask 523264
    %v323 = vsel %vm321, %v293, 0
    %v326 = vsel %vm321, %v294, 0
    %v329 = vsel %vm321, %v295, 0
    %v332 = vsel %vm321, %v296, 0
    %334 = vmatprep.subr.mxu0 0.0
    %335 = vmatpush1.msra.mxu0 %v285
    %336 = vmatprep.subr.mxu0 0.0
    %337 = vmatpush1.msra.mxu0 %v286
    %338 = vmatprep.subr.mxu0 0.0
    %339 = vmatpush1.msra.mxu0 %v287
    %340 = vmatprep.subr.mxu0 0.0
    %341 = vmatpush1.msra.mxu0 %v288
    %342 = vmatprep.subr.mxu0 0.0
    %343 = vmatpush1.msra.mxu0 %v289
    %344 = vmatprep.subr.mxu0 0.0
    %345 = vmatpush1.msra.mxu0 %v290
    %346 = vmatprep.subr.mxu0 0.0
    %347 = vmatpush1.msra.mxu0 %v291
    %348 = vmatprep.subr.mxu0 0.0
    %349 = vmatpush1.msra.mxu0 %v292
    %350 = vmatprep.subr.mxu0 0.0
    %351 = vmatpush1.msra.mxu0 0.0
    %352 = vmatprep.subr.mxu0 0.0
    %353 = vmatpush1.msra.mxu0 0.0
    %354 = vmatprep.subr.mxu0 0.0
    %355 = vmatpush1.msra.mxu0 0.0
    %356 = vmatprep.subr.mxu0 0.0
    %357 = vmatpush1.msra.mxu0 0.0
    %358 = vmatprep.subr.mxu0 0.0
    %359 = vmatpush1.msra.mxu0 0.0
    %360 = vmatprep.subr.mxu0 0.0
    %361 = vmatpush1.msra.mxu0 0.0
    %362 = vmatprep.subr.mxu0 0.0
    %363 = vmatpush1.msra.mxu0 0.0
    %364 = vmatprep.subr.mxu0 0.0
    %365 = vmatpush1.msra.mxu0 0.0
    %366 = vmatprep.subr.mxu0 0.0
    %367 = vmatpush1.msra.mxu0 0.0
    %368 = vmatprep.subr.mxu0 0.0
    %369 = vmatpush1.msra.mxu0 0.0
    %370 = vmatprep.subr.mxu0 0.0
    %371 = vmatpush1.msra.mxu0 0.0
    %372 = vmatprep.subr.mxu0 0.0
    %373 = vmatpush1.msra.mxu0 0.0
    %374 = vmatprep.subr.mxu0 0.0
    %375 = vmatpush1.msra.mxu0 0.0
    %376 = vmatprep.subr.mxu0 0.0
    %377 = vmatpush1.msra.mxu0 0.0
    %378 = vmatprep.subr.mxu0 0.0
    %379 = vmatpush1.msra.mxu0 0.0
    %380 = vmatprep.subr.mxu0 0.0
    %381 = vmatpush1.msra.mxu0 0.0
    %382 = vmatprep.subr.mxu0 0.0
    %383 = vmatpush1.msra.mxu0 0.0
    %384 = vmatprep.subr.mxu0 0.0
    %385 = vmatpush1.msra.mxu0 0.0
    %386 = vmatprep.subr.mxu0 0.0
    %387 = vmatpush1.msra.mxu0 0.0
    %388 = vmatprep.subr.mxu0 0.0
    %389 = vmatpush1.msra.mxu0 0.0
    %390 = vmatprep.subr.mxu0 0.0
    %391 = vmatpush1.msra.mxu0 0.0
    %392 = vmatprep.subr.mxu0 0.0
    %393 = vmatpush1.msra.mxu0 0.0
    %394 = vmatprep.subr.mxu0 0.0
    %395 = vmatpush1.msra.mxu0 0.0
    %396 = vmatprep.subr.mxu0 0.0
    %397 = vmatpush1.msra.mxu0 0.0
    %398 = vmatprep.mubr.f32.mxu0 0.0
    %399 = vmatmul.mubr.f32.gmra.mrb[0].mxu0 %v323
    %v400 = vpop.f32.mrb[0].mxu0
    %v401 = vadd.f32 %v304, %v400
    %v402 = vpop.f32.mrb[0].mxu0
    %403 = vmatprep.mubr.f32.mxu0 0.0
    %404 = vmatmul.mubr.f32.gmra.mrb[0].mxu0 %v326
    %v405 = vpop.f32.mrb[0].mxu0
    %v406 = vadd.f32 %v309, %v405
    %v407 = vpop.f32.mrb[0].mxu0
    %408 = vmatprep.mubr.f32.mxu0 0.0
    %409 = vmatmul.mubr.f32.gmra.mrb[0].mxu0 %v329
    %v410 = vpop.f32.mrb[0].mxu0
    %v411 = vadd.f32 %v314, %v410
    %v412 = vpop.f32.mrb[0].mxu0
    %413 = vmatprep.mubr.f32.mxu0 0.0
    %414 = vmatmul.mubr.f32.gmra.mrb[0].mxu0 %v332
    %v415 = vpop.f32.mrb[0].mxu0
    %v416 = vadd.f32 %v319, %v415
    %v417 = vpop.f32.mrb[0].mxu0
    %418 = vdwg.mxu0
    %v419 = vmax.f32 %v401, 0.0
    %v420 = vmax.f32 %v406, 0.0
    %v421 = vmax.f32 %v411, 0.0
    %v422 = vmax.f32 %v416, 0.0
    %v423 = vld [vmem:[%s5] sm:$0xff]
    %v424 = vld [vmem:[%s6] sm:$0xff]
    %426 = vset.pattern.permute.xlu0 0
    %427 = vperm.xlu0 %426, %v424
    %v428 = vpop.permute.xlu0 %427
    %vm430 = vcmask 261120
    %v432 = vsel %vm430, %v423, 0
    %434 = vmatprep.subr.mxu0 0.0
    %435 = vmatpush1.msra.mxu0 %v419
    %436 = vmatprep.subr.mxu0 0.0
    %437 = vmatpush1.msra.mxu0 %v420
    %438 = vmatprep.subr.mxu0 0.0
    %439 = vmatpush1.msra.mxu0 %v421
    %440 = vmatprep.subr.mxu0 0.0
    %441 = vmatpush1.msra.mxu0 %v422
    %442 = vmatprep.subr.mxu0 0.0
    %443 = vmatpush1.msra.mxu0 0.0
    %444 = vmatprep.subr.mxu0 0.0
    %445 = vmatpush1.msra.mxu0 0.0
    %446 = vmatprep.subr.mxu0 0.0
    %447 = vmatpush1.msra.mxu0 0.0
    %448 = vmatprep.subr.mxu0 0.0
    %449 = vmatpush1.msra.mxu0 0.0
    %450 = vmatprep.subr.mxu0 0.0
    %451 = vmatpush1.msra.mxu0 0.0
    %452 = vmatprep.subr.mxu0 0.0
    %453 = vmatpush1.msra.mxu0 0.0
    %454 = vmatprep.subr.mxu0 0.0
    %455 = vmatpush1.msra.mxu0 0.0
    %456 = vmatprep.subr.mxu0 0.0
    %457 = vmatpush1.msra.mxu0 0.0
    %458 = vmatprep.subr.mxu0 0.0
    %459 = vmatpush1.msra.mxu0 0.0
    %460 = vmatprep.subr.mxu0 0.0
    %461 = vmatpush1.msra.mxu0 0.0
    %462 = vmatprep.subr.mxu0 0.0
    %463 = vmatpush1.msra.mxu0 0.0
    %464 = vmatprep.subr.mxu0 0.0
    %465 = vmatpush1.msra.mxu0 0.0
    %466 = vmatprep.subr.mxu0 0.0
    %467 = vmatpush1.msra.mxu0 0.0
    %468 = vmatprep.subr.mxu0 0.0
    %469 = vmatpush1.msra.mxu0 0.0
    %470 = vmatprep.subr.mxu0 0.0
    %471 = vmatpush1.msra.mxu0 0.0
    %472 = vmatprep.subr.mxu0 0.0
    %473 = vmatpush1.msra.mxu0 0.0
    %474 = vmatprep.subr.mxu0 0.0
    %475 = vmatpush1.msra.mxu0 0.0
    %476 = vmatprep.subr.mxu0 0.0
    %477 = vmatpush1.msra.mxu0 0.0
    %478 = vmatprep.subr.mxu0 0.0
    %479 = vmatpush1.msra.mxu0 0.0
    %480 = vmatprep.subr.mxu0 0.0
    %481 = vmatpush1.msra.mxu0 0.0
    %482 = vmatprep.subr.mxu0 0.0
    %483 = vmatpush1.msra.mxu0 0.0
    %484 = vmatprep.subr.mxu0 0.0
    %485 = vmatpush1.msra.mxu0 0.0
    %486 = vmatprep.subr.mxu0 0.0
    %487 = vmatpush1.msra.mxu0 0.0
    %488 = vmatprep.subr.mxu0 0.0
    %489 = vmatpush1.msra.mxu0 0.0
    %490 = vmatprep.subr.mxu0 0.0
    %491 = vmatpush1.msra.mxu0 0.0
    %492 = vmatprep.subr.mxu0 0.0
    %493 = vmatpush1.msra.mxu0 0.0
    %494 = vmatprep.subr.mxu0 0.0
    %495 = vmatpush1.msra.mxu0 0.0
    %496 = vmatprep.subr.mxu0 0.0
    %497 = vmatpush1.msra.mxu0 0.0
    %498 = vmatprep.mubr.f32.mxu0 0.0
    %499 = vmatmul.mubr.f32.gmra.mrb[0].mxu0 %v432
    %v500 = vpop.f32.mrb[0].mxu0
    %v501 = vadd.f32 %v428, %v500
    %v502 = vpop.f32.mrb[0].mxu0
    %503 = vdwg.mxu0
    %v504 = vmax.f32 %v501, 0.0
    %v505 = vld [vmem:[%s7] sm:$0xff]
    %507 = vset.pattern.permute.xlu0 0
    %508 = vperm.xlu0 %507, %v505
    %v509 = vpop.permute.xlu0 %508
    %v511 = vmul.f32 %v509, %v504
    %v512 = vrot.slane %v511, 4
    %v513 = vadd.f32 %v511, %v512
    %v514 = vrot.slane %v513, 2
    %v515 = vadd.f32 %v513, %v514
    %v516 = vrot.slane %v515, 1
    %v517 = vadd.f32 %v515, %v516
    %v518 = vld [vmem:[#allocation2] sm:$0x1]
    %520 = vset.pattern.permute.xlu0 0
    %521 = vperm.xlu0 %520, %v518
    %v522 = vpop.permute.xlu0 %521
    %v524 = vlaneseq
    %v525 = vshrl.u32 %v524, 7
    %v526 = vsub.s32 0, %v525
    %v527 = vrot.slane %v522, %v526
    %v528 = vadd.f32 %v517, %v527
    %529 = vst [vmem:[#allocation3] sm:$0x1] %v528
    // Predicated region
    $region38: #{tpu_custom_call.1} parent=1 // pred_check
      _
    $region39: #{tpu_custom_call.1} parent=1 // pred_check_branch
      %531 = sbr.rel (0) target = $region41
    $region40: #{tpu_custom_call.1} parent=1 // pred_region
      %s533 = ssub.s32 16, 16
      %534 = vsyncadd [#allocation4], %s533
      %s536 = sshll.u32 [#allocation3], 4
      %s537 = int_to_ptr.vmem [resolvable:$true] %s536
      %539 = dma.vmem_to_hbm [thread:$0]  %s537, 16, %s9, [#allocation4]
    $region41: #{tpu_custom_call.1} parent=1 // pred_fallthru
      _
    // Predicated region
    $region42: #{tpu_custom_call.1} parent=1 // pred_check
      _
    $region43: #{tpu_custom_call.1} parent=1 // pred_check_branch
      %541 = sbr.rel (0) target = $region45
    $region44: #{tpu_custom_call.1} parent=1 // pred_region
      %542 = dma.done [#allocation4], 16
    $region45: #{tpu_custom_call.1} parent=1 // pred_fallthru
      _
    %543 = vsyncpa [#allocation4], 1

</llo_original>
